<compile_context>
chip_gen: v7x
topology: tpu7x:2x2x1
jax: 0.10.0
libtpu: 0.0.40
codegen_flags: <defaults>
</compile_context>

<pallas_src>
import functools

import jax
import jax.numpy as jnp
from jax import lax
from jax.experimental import pallas as pl
from jax.experimental.pallas import tpu as pltpu


HIDDEN = 256  # preprocess output width; Critic.last = nn.Linear(256, 1)


def _critic_kernel(x_ref, w1_ref, b1_ref, w2_ref, b2_ref, w3_ref, b3_ref, o_ref):
    # In-kernel f32 -> bf16 cast (VPU work, hidden under the MXU time).
    x = x_ref[...].astype(jnp.bfloat16)
    # Layer 1: Linear(D, 256) + ReLU.  bf16 operands, f32 accumulation on MXU.
    h1 = jnp.dot(x, w1_ref[...], preferred_element_type=jnp.float32)
    h1 = jnp.maximum(h1 + b1_ref[...], 0.0)
    # Layer 2: Linear(256, 256) + ReLU.  Native 256x256 MXU shape.
    h2 = jnp.dot(h1.astype(jnp.bfloat16), w2_ref[...],
                 preferred_element_type=jnp.float32)
    h2 = jnp.maximum(h2 + b2_ref[...], 0.0)
    # Critic head Linear(256, 1), computed lane-dense:
    #   (1,256) x (TM,256) contracted over the 256 axis -> (1, TM).
    head = lax.dot_general(
        w3_ref[...], h2.astype(jnp.bfloat16),
        dimension_numbers=(((1,), (1,)), ((), ())),
        preferred_element_type=jnp.float32)
    out = head + b3_ref[...]          # (1, TM) + (1, 1) broadcast
    o_ref[...] = out[None].astype(o_ref.dtype)   # (1, 1, TM) block


@functools.partial(jax.jit, static_argnames=("tm",))
def critic_forward(s, params, *, tm=1024):
    """s: (B, D) float32. Returns (B, 1) float32 critic values."""
    w1, b1, w2, b2, w3, b3 = params
    B, D = s.shape
    H = w1.shape[1]

    # Weights as bf16 MXU operands (tiny one-time casts); head weight as a
    # (1, H) bf16 row, head bias as (1, 1) f32.
    w1_bf = w1.astype(jnp.bfloat16)
    w2_bf = w2.astype(jnp.bfloat16)
    w3_row = w3.reshape(1, H).astype(jnp.bfloat16)
    b3_sc = b3.reshape(1, 1).astype(jnp.float32)

    # Batch tile: sublane-aligned, capped at `tm`, and sized so there are at
    # least 2 grid steps whenever B allows it (megacore on v7x).  No padding
    # of the batch — the clipped edge block is handled by Pallas.
    half = -(-B // 2)
    TM = min(tm, max(8, ((half + 7) // 8) * 8))
    n_tiles = -(-B // TM)
    grid = (n_tiles,)

    def resident(arr):
        # Constant index_map -> DMA'd once, stays VMEM-resident across the grid.
        return pl.BlockSpec(arr.shape, lambda i: (0,) * arr.ndim)

    flops = 2 * n_tiles * TM * (D * H + H * H + H)
    bytes_accessed = (
        s.size * 4                                   # f32 activations in
        + (w1_bf.size + w2_bf.size + w3_row.size) * 2  # bf16 weights
        + (b1.size + b2.size + b3_sc.size) * 4         # f32 biases
        + n_tiles * TM * 4                             # f32 output
    )

    out = pl.pallas_call(
        _critic_kernel,
        out_shape=jax.ShapeDtypeStruct((n_tiles, 1, TM), jnp.float32),
        grid=grid,
        in_specs=[
            pl.BlockSpec((TM, D), lambda i: (i, 0)),  # activations: batch-tiled
            resident(w1_bf), resident(b1),
            resident(w2_bf), resident(b2),
            resident(w3_row), resident(b3_sc),
        ],
        out_specs=pl.BlockSpec((1, 1, TM), lambda i: (i, 0, 0)),
        compiler_params=pltpu.CompilerParams(
            dimension_semantics=("parallel",),  # megacore sharding on v7x
        ),
        cost_estimate=pl.CostEstimate(
            flops=flops, transcendentals=0, bytes_accessed=bytes_accessed),
    )(s, w1_bf, b1, w2_bf, b2, w3_row, b3_sc)

    # (n_tiles, 1, TM) -> (n_tiles*TM, 1) row-major preserves batch order.
    return out.reshape(n_tiles * TM, 1)[:B]


def init_params(key, in_dim, hidden=HIDDEN):
    """Deterministic PyTorch-style (uniform +-1/sqrt(fan_in)) initialization."""
    ks = jax.random.split(key, 6)

    def lin(kw, kb, fan_in, fan_out):
        bound = 1.0 / jnp.sqrt(jnp.float32(fan_in))
        w = jax.random.uniform(kw, (fan_in, fan_out), jnp.float32, -bound, bound)
        b = jax.random.uniform(kb, (1, fan_out), jnp.float32, -bound, bound)
        return w, b

    w1, b1 = lin(ks[0], ks[1], in_dim, hidden)
    w2, b2 = lin(ks[2], ks[3], hidden, hidden)
    w3, b3 = lin(ks[4], ks[5], hidden, 1)
    return (w1, b1, w2, b2, w3, b3)


def reference_forward_f32(s, params):
    """Pure-JAX f32 reference (loose check vs. the bf16 kernel)."""
    w1, b1, w2, b2, w3, b3 = params
    h = jnp.maximum(s @ w1 + b1, 0.0)
    h = jnp.maximum(h @ w2 + b2, 0.0)
    return h @ w3 + b3


def reference_forward_bf16(s, params):
    """Pure-JAX reference using the same bf16-matmul / f32-accumulate recipe."""
    w1, b1, w2, b2, w3, b3 = params
    h = jnp.dot(s.astype(jnp.bfloat16), w1.astype(jnp.bfloat16),
                preferred_element_type=jnp.float32)
    h = jnp.maximum(h + b1, 0.0)
    h = jnp.dot(h.astype(jnp.bfloat16), w2.astype(jnp.bfloat16),
                preferred_element_type=jnp.float32)
    h = jnp.maximum(h + b2, 0.0)
    head = jnp.dot(h.astype(jnp.bfloat16), w3.astype(jnp.bfloat16),
                   preferred_element_type=jnp.float32)
    return head + b3


if __name__ == "__main__":
    key = jax.random.PRNGKey(0)
    k_x, k_p = jax.random.split(key)

    B, STATE_DIM = 8, 16  # small shapes: batch=8, flattened state dim=16
    s = jax.random.normal(k_x, (B, STATE_DIM), jnp.float32)
    params = init_params(k_p, STATE_DIM)

    out = jax.block_until_ready(critic_forward(s, params))
    assert out.shape == (B, 1), out.shape

    ref_bf16 = reference_forward_bf16(s, params)
    ref_f32 = reference_forward_f32(s, params)
    assert jnp.allclose(out, ref_bf16, atol=2e-3, rtol=2e-3), \
        "mismatch vs precision-matched reference"
    assert jnp.allclose(out, ref_f32, atol=1e-1, rtol=1e-1), \
        "mismatch vs f32 reference"

    # Exercise the multi-tile / clipped-edge-block path with a batch that is
    # not a tile multiple, still at small scale (TM=16, grid=2 here).
    B2 = 20
    s2 = jax.random.normal(jax.random.PRNGKey(1), (B2, STATE_DIM), jnp.float32)
    out2 = jax.block_until_ready(critic_forward(s2, params))
    assert out2.shape == (B2, 1), out2.shape
    assert jnp.allclose(out2, reference_forward_bf16(s2, params),
                        atol=2e-3, rtol=2e-3), "mismatch (ragged batch)"

    print("KERNEL_OK")
</pallas_src>

<mosaic_0001>
module attributes {stable_mosaic.version = 11 : i64} {
  func.func @_critic_kernel(%arg0: i32, %arg1: memref<8x16xf32, #tpu.memory_space<vmem>>, %arg2: memref<16x256xbf16, #tpu.memory_space<vmem>>, %arg3: memref<1x256xf32, #tpu.memory_space<vmem>>, %arg4: memref<256x256xbf16, #tpu.memory_space<vmem>>, %arg5: memref<1x256xf32, #tpu.memory_space<vmem>>, %arg6: memref<1x256xbf16, #tpu.memory_space<vmem>>, %arg7: memref<1x1xf32, #tpu.memory_space<vmem>>, %arg8: memref<1x1x8xf32, #tpu.memory_space<vmem>>) attributes {dimension_semantics = [#tpu.dimension_semantics<parallel>], iteration_bounds = array<i64: 1>, scalar_prefetch = 0 : i64, scratch_operands = 0 : i64, tpu.core_type = #tpu.core_type<tc>, window_params = [{transform_indices = @transform_0, window_bounds = array<i64: 8, 16>}, {pipeline_mode = #tpu.pipeline_mode<synchronous>, transform_indices = @transform_1, window_bounds = array<i64: 16, 256>}, {pipeline_mode = #tpu.pipeline_mode<synchronous>, transform_indices = @transform_2, window_bounds = array<i64: 1, 256>}, {pipeline_mode = #tpu.pipeline_mode<synchronous>, transform_indices = @transform_3, window_bounds = array<i64: 256, 256>}, {pipeline_mode = #tpu.pipeline_mode<synchronous>, transform_indices = @transform_4, window_bounds = array<i64: 1, 256>}, {pipeline_mode = #tpu.pipeline_mode<synchronous>, transform_indices = @transform_5, window_bounds = array<i64: 1, 256>}, {pipeline_mode = #tpu.pipeline_mode<synchronous>, transform_indices = @transform_6, window_bounds = array<i64: 1, 1>}, {transform_indices = @transform_7, window_bounds = array<i64: 1, 1, 8>}]} {
    %c0 = arith.constant 0 : index
    %c0_0 = arith.constant 0 : index
    %0 = vector.load %arg1[%c0, %c0_0] : memref<8x16xf32, #tpu.memory_space<vmem>>, vector<8x16xf32>
    %1 = arith.truncf %0 : vector<8x16xf32> to vector<8x16xbf16>
    %c0_1 = arith.constant 0 : index
    %c0_2 = arith.constant 0 : index
    %2 = vector.load %arg2[%c0_1, %c0_2] : memref<16x256xbf16, #tpu.memory_space<vmem>>, vector<16x256xbf16>
    %cst = arith.constant dense<0.000000e+00> : vector<8x256xf32>
    %3 = tpu.matmul %1, %2, %cst {dimension_numbers = #tpu.dot_dimension_numbers<[1], [0], [0], [1], [0, 0, 1, 1], [], []>} : vector<8x16xbf16>, vector<16x256xbf16>, vector<8x256xf32> -> vector<8x256xf32>
    %c0_3 = arith.constant 0 : index
    %c0_4 = arith.constant 0 : index
    %4 = vector.load %arg3[%c0_3, %c0_4] : memref<1x256xf32, #tpu.memory_space<vmem>>, vector<1x256xf32>
    %5 = vector.broadcast %4 : vector<1x256xf32> to vector<8x256xf32>
    %6 = arith.addf %3, %5 : vector<8x256xf32>
    %cst_5 = arith.constant 0.000000e+00 : f32
    %7 = vector.broadcast %cst_5 : f32 to vector<8x256xf32>
    %8 = arith.maximumf %6, %7 : vector<8x256xf32>
    %9 = arith.truncf %8 : vector<8x256xf32> to vector<8x256xbf16>
    %c0_6 = arith.constant 0 : index
    %c0_7 = arith.constant 0 : index
    %10 = vector.load %arg4[%c0_6, %c0_7] : memref<256x256xbf16, #tpu.memory_space<vmem>>, vector<256x256xbf16>
    %cst_8 = arith.constant dense<0.000000e+00> : vector<8x256xf32>
    %11 = tpu.matmul %9, %10, %cst_8 {dimension_numbers = #tpu.dot_dimension_numbers<[1], [0], [0], [1], [0, 0, 1, 1], [], []>} : vector<8x256xbf16>, vector<256x256xbf16>, vector<8x256xf32> -> vector<8x256xf32>
    %c0_9 = arith.constant 0 : index
    %c0_10 = arith.constant 0 : index
    %12 = vector.load %arg5[%c0_9, %c0_10] : memref<1x256xf32, #tpu.memory_space<vmem>>, vector<1x256xf32>
    %13 = vector.broadcast %12 : vector<1x256xf32> to vector<8x256xf32>
    %14 = arith.addf %11, %13 : vector<8x256xf32>
    %cst_11 = arith.constant 0.000000e+00 : f32
    %15 = vector.broadcast %cst_11 : f32 to vector<8x256xf32>
    %16 = arith.maximumf %14, %15 : vector<8x256xf32>
    %c0_12 = arith.constant 0 : index
    %c0_13 = arith.constant 0 : index
    %17 = vector.load %arg6[%c0_12, %c0_13] : memref<1x256xbf16, #tpu.memory_space<vmem>>, vector<1x256xbf16>
    %18 = arith.truncf %16 : vector<8x256xf32> to vector<8x256xbf16>
    %cst_14 = arith.constant dense<0.000000e+00> : vector<1x8xf32>
    %19 = tpu.matmul %17, %18, %cst_14 {dimension_numbers = #tpu.dot_dimension_numbers<[1], [1], [0], [0], [0, 0, 1, 0], [], []>} : vector<1x256xbf16>, vector<8x256xbf16>, vector<1x8xf32> -> vector<1x8xf32>
    %c0_15 = arith.constant 0 : index
    %c0_16 = arith.constant 0 : index
    %20 = vector.load %arg7[%c0_15, %c0_16] : memref<1x1xf32, #tpu.memory_space<vmem>>, vector<1x1xf32>
    %21 = vector.broadcast %20 : vector<1x1xf32> to vector<1x8xf32>
    %22 = arith.addf %19, %21 : vector<1x8xf32>
    %23 = vector.shape_cast %22 : vector<1x8xf32> to vector<1x1x8xf32>
    %c0_17 = arith.constant 0 : index
    %c0_18 = arith.constant 0 : index
    %c0_19 = arith.constant 0 : index
    %24 = vector.load %arg8[%c0_17, %c0_18, %c0_19] : memref<1x1x8xf32, #tpu.memory_space<vmem>>, vector<1x1x8xf32>
    tpu.vector_store %arg8[%c0_17, %c0_18, %c0_19], %23 {strides = array<i32>} : memref<1x1x8xf32, #tpu.memory_space<vmem>>, vector<1x1x8xf32>,
    return
  }
  func.func @transform_0(%arg0: i32) -> (i32, i32) {
    %c0_i32 = arith.constant 0 : i32
    %c0_i32_0 = arith.constant 0 : i32
    return %arg0, %c0_i32 : i32, i32
  }
  func.func @transform_1(%arg0: i32) -> (i32, i32) {
    %c0_i32 = arith.constant 0 : i32
    %c0_i32_0 = arith.constant 0 : i32
    %c0_i32_1 = arith.constant 0 : i32
    return %c0_i32, %c0_i32_0 : i32, i32
  }
  func.func @transform_2(%arg0: i32) -> (i32, i32) {
    %c0_i32 = arith.constant 0 : i32
    %c0_i32_0 = arith.constant 0 : i32
    %c0_i32_1 = arith.constant 0 : i32
    return %c0_i32, %c0_i32_0 : i32, i32
  }
  func.func @transform_3(%arg0: i32) -> (i32, i32) {
    %c0_i32 = arith.constant 0 : i32
    %c0_i32_0 = arith.constant 0 : i32
    %c0_i32_1 = arith.constant 0 : i32
    return %c0_i32, %c0_i32_0 : i32, i32
  }
  func.func @transform_4(%arg0: i32) -> (i32, i32) {
    %c0_i32 = arith.constant 0 : i32
    %c0_i32_0 = arith.constant 0 : i32
    %c0_i32_1 = arith.constant 0 : i32
    return %c0_i32, %c0_i32_0 : i32, i32
  }
  func.func @transform_5(%arg0: i32) -> (i32, i32) {
    %c0_i32 = arith.constant 0 : i32
    %c0_i32_0 = arith.constant 0 : i32
    %c0_i32_1 = arith.constant 0 : i32
    return %c0_i32, %c0_i32_0 : i32, i32
  }
  func.func @transform_6(%arg0: i32) -> (i32, i32) {
    %c0_i32 = arith.constant 0 : i32
    %c0_i32_0 = arith.constant 0 : i32
    %c0_i32_1 = arith.constant 0 : i32
    return %c0_i32, %c0_i32_0 : i32, i32
  }
  func.func @transform_7(%arg0: i32) -> (i32, i32, i32) {
    %c0_i32 = arith.constant 0 : i32
    %c0_i32_0 = arith.constant 0 : i32
    %c0_i32_1 = arith.constant 0 : i32
    return %arg0, %c0_i32, %c0_i32_0 : i32, i32, i32
  }
}

</mosaic_0001>

<llo_original>
// kernel: critic_forward.1
$region0: #{critic_forward.1}
  #allocation0 [shape = 'u32[]', space=smem, size = 0x4, offset = 0x4, fixed_abs, tag = 'smem constant byte address 0x4 - core index']
  #allocation1 [shape = 'u32[144,128]{1,0:T(1,128)}', space=vmem, size = 0x12000, scoped, tag = 'internal scratch']
  #allocation2 [shape = 'f32[1,1]{1,0:T(1,128)S(1)}', space=vmem, size = 0x200, scoped, tag = 'scoped memory for critic_forward.1']
  %s0 = inlined_call_operand.vmem [shape: f32[8,16], index: 0, kind: input, shape index: {}]
  %s1 = inlined_call_operand.vmem [shape: bf16[16,256], index: 1, kind: input, shape index: {}]
  %s2 = inlined_call_operand.vmem [shape: f32[1,256], index: 2, kind: input, shape index: {}]
  %s3 = inlined_call_operand.vmem [shape: bf16[256,256], index: 3, kind: input, shape index: {}]
  %s4 = inlined_call_operand.vmem [shape: f32[1,256], index: 4, kind: input, shape index: {}]
  %s5 = inlined_call_operand.vmem [shape: bf16[1,256], index: 5, kind: input, shape index: {}]
  %s6 = inlined_call_operand.<no memory space> [shape: f32[1,1], index: 6, kind: input, shape index: {}]
  %s7 = inlined_call_operand.hbm [shape: f32[1,1,8], index: 7, kind: output, shape index: {}]
  %s8 = sld [smem:[#allocation0]]
  $region38: #{critic_forward.1} parent=0
    _
  %s10 = ssub.s32 1, %s8
  %s11 = scalar_select 0, %s10, %s8
  %v12 = vstv %s6
  %13 = vst [vmem:[#allocation2] sm:$0x1] %v12
  $region1: #{critic_forward.1} parent=0
    #allocation3 [shape = 'u8[512]{0}', space=vmem, size = 0x400, scoped, tag = 'output window, operand 0, single buffered']
    #allocation4 [shape = 's32[1]{0}', space=sflag, size = 0x4, scoped, tag = 'scoped memory for critic_forward.1']
    %14 = vsyncpa [#allocation4], 0
    // Predicated region
    $region2: #{critic_forward.1} parent=1 // pred_check
      _
    $region3: #{critic_forward.1} parent=1 // pred_check_branch
      %16 = sbr.rel (0) target = $region5
    $region4: #{critic_forward.1} parent=1 // pred_region
      _
    $region5: #{critic_forward.1} parent=1 // pred_fallthru
      _
    // Predicated region
    $region6: #{critic_forward.1} parent=1 // pred_check
      _
    $region7: #{critic_forward.1} parent=1 // pred_check_branch
      %18 = sbr.rel (0) target = $region9
    $region8: #{critic_forward.1} parent=1 // pred_region
      _
    $region9: #{critic_forward.1} parent=1 // pred_fallthru
      _
    // Predicated region
    $region10: #{critic_forward.1} parent=1 // pred_check
      _
    $region11: #{critic_forward.1} parent=1 // pred_check_branch
      %20 = sbr.rel (0) target = $region13
    $region12: #{critic_forward.1} parent=1 // pred_region
      _
    $region13: #{critic_forward.1} parent=1 // pred_fallthru
      _
    // Predicated region
    $region14: #{critic_forward.1} parent=1 // pred_check
      _
    $region15: #{critic_forward.1} parent=1 // pred_check_branch
      %22 = sbr.rel (0) target = $region17
    $region16: #{critic_forward.1} parent=1 // pred_region
      _
    $region17: #{critic_forward.1} parent=1 // pred_fallthru
      _
    // Predicated region
    $region18: #{critic_forward.1} parent=1 // pred_check
      _
    $region19: #{critic_forward.1} parent=1 // pred_check_branch
      %24 = sbr.rel (0) target = $region21
    $region20: #{critic_forward.1} parent=1 // pred_region
      _
    $region21: #{critic_forward.1} parent=1 // pred_fallthru
      _
    // Predicated region
    $region22: #{critic_forward.1} parent=1 // pred_check
      _
    $region23: #{critic_forward.1} parent=1 // pred_check_branch
      %26 = sbr.rel (0) target = $region25
    $region24: #{critic_forward.1} parent=1 // pred_region
      _
    $region25: #{critic_forward.1} parent=1 // pred_fallthru
      _
    // Predicated region
    $region26: #{critic_forward.1} parent=1 // pred_check
      _
    $region27: #{critic_forward.1} parent=1 // pred_check_branch
      %28 = sbr.rel (0) target = $region29
    $region28: #{critic_forward.1} parent=1 // pred_region
      _
    $region29: #{critic_forward.1} parent=1 // pred_fallthru
      _
    %v30 = vld [vmem:[%s0] sm:$0xff]
    %v31 = vpack.c.bf16 %v30, %v30
    %v32 = vld [vmem:[%s1] sm:$0xff]
    %v33 = vld [vmem:[%s1 + $0x8] sm:$0xff]
    %v34 = vld [vmem:[%s2] sm:$0x3]
    %v36 = vlaneseq
    %v37 = vshrl.u32 %v36, 7
    %v38 = vsub.s32 0, %v37
    %v39 = vrot.slane %v34, %v38
    %v40 = vlaneseq
    %v41 = vshrl.u32 %v40, 7
    %v42 = vsub.s32 1, %v41
    %v43 = vrot.slane %v34, %v42
    %v48 = vunpack.c.l.b16 %v32
    %v49 = vunpack.c.h.b16 %v32
    %v50 = vunpack.c.l.b16 %v33
    %v51 = vunpack.c.h.b16 %v33
    %v52 = vpack.c.b16 %v50, %v48
    %v53 = vpack.c.b16 %v51, %v49
    %vm56 = vcmask 130048
    %v58 = vsel %vm56, %v31, 0
    %60 = vmatprep.subr.bf16.mxu0 %v53
    %61 = vmatpush1.bf16.msra.mxu0 %v52
    %62 = vmatprep.subr.bf16.mxu0 0
    %63 = vmatpush1.bf16.msra.mxu0 0
    %64 = vmatprep.subr.bf16.mxu0 0
    %65 = vmatpush1.bf16.msra.mxu0 0
    %66 = vmatprep.subr.bf16.mxu0 0
    %67 = vmatpush1.bf16.msra.mxu0 0
    %68 = vmatprep.subr.bf16.mxu0 0
    %69 = vmatpush1.bf16.msra.mxu0 0
    %70 = vmatprep.subr.bf16.mxu0 0
    %71 = vmatpush1.bf16.msra.mxu0 0
    %72 = vmatprep.subr.bf16.mxu0 0
    %73 = vmatpush1.bf16.msra.mxu0 0
    %74 = vmatprep.subr.bf16.mxu0 0
    %75 = vmatpush1.bf16.msra.mxu0 0
    %76 = vmatprep.subr.bf16.mxu0 0
    %77 = vmatpush1.bf16.msra.mxu0 0
    %78 = vmatprep.subr.bf16.mxu0 0
    %79 = vmatpush1.bf16.msra.mxu0 0
    %80 = vmatprep.subr.bf16.mxu0 0
    %81 = vmatpush1.bf16.msra.mxu0 0
    %82 = vmatprep.subr.bf16.mxu0 0
    %83 = vmatpush1.bf16.msra.mxu0 0
    %84 = vmatprep.subr.bf16.mxu0 0
    %85 = vmatpush1.bf16.msra.mxu0 0
    %86 = vmatprep.subr.bf16.mxu0 0
    %87 = vmatpush1.bf16.msra.mxu0 0
    %88 = vmatprep.subr.bf16.mxu0 0
    %89 = vmatpush1.bf16.msra.mxu0 0
    %90 = vmatprep.subr.bf16.mxu0 0
    %91 = vmatpush1.bf16.msra.mxu0 0
    %92 = vmatprep.mubr.bf16.mxu0 0
    %93 = vmatmul.mubr.bf16.gmra.mrb[0].mxu0 %v58
    %v94 = vpop.f32.mrb[0].mxu0
    %v95 = vadd.f32 %v39, %v94
    %v96 = vpop.f32.mrb[0].mxu0
    %v97 = vadd.f32 %v43, %v96
    %v98 = vpop.f32.mrb[0].mxu0
    %v99 = vpop.f32.mrb[0].mxu0
    %100 = vdwg.mxu0
    %v101 = vmax.f32 %v95, 0.0
    %v102 = vmax.f32 %v97, 0.0
    %v103 = vpack.c.bf16 %v101, %v101
    %v104 = vpack.c.bf16 %v102, %v102
    %v105 = vld [vmem:[%s3] sm:$0xff]
    %v106 = vld [vmem:[%s3 + $0x8] sm:$0xff]
    %v107 = vld [vmem:[%s3 + $0x10] sm:$0xff]
    %v108 = vld [vmem:[%s3 + $0x18] sm:$0xff]
    %v109 = vld [vmem:[%s3 + $0x20] sm:$0xff]
    %v110 = vld [vmem:[%s3 + $0x28] sm:$0xff]
    %v111 = vld [vmem:[%s3 + $0x30] sm:$0xff]
    %v112 = vld [vmem:[%s3 + $0x38] sm:$0xff]
    %v113 = vld [vmem:[%s3 + $0x40] sm:$0xff]
    %v114 = vld [vmem:[%s3 + $0x48] sm:$0xff]
    %v115 = vld [vmem:[%s3 + $0x50] sm:$0xff]
    %v116 = vld [vmem:[%s3 + $0x58] sm:$0xff]
    %v117 = vld [vmem:[%s3 + $0x60] sm:$0xff]
    %v118 = vld [vmem:[%s3 + $0x68] sm:$0xff]
    %v119 = vld [vmem:[%s3 + $0x70] sm:$0xff]
    %v120 = vld [vmem:[%s3 + $0x78] sm:$0xff]
    %v121 = vld [vmem:[%s3 + $0x80] sm:$0xff]
    %v122 = vld [vmem:[%s3 + $0x88] sm:$0xff]
    %v123 = vld [vmem:[%s3 + $0x90] sm:$0xff]
    %v124 = vld [vmem:[%s3 + $0x98] sm:$0xff]
    %v125 = vld [vmem:[%s3 + $0xa0] sm:$0xff]
    %v126 = vld [vmem:[%s3 + $0xa8] sm:$0xff]
    %v127 = vld [vmem:[%s3 + $0xb0] sm:$0xff]
    %v128 = vld [vmem:[%s3 + $0xb8] sm:$0xff]
    %v129 = vld [vmem:[%s3 + $0xc0] sm:$0xff]
    %v130 = vld [vmem:[%s3 + $0xc8] sm:$0xff]
    %v131 = vld [vmem:[%s3 + $0xd0] sm:$0xff]
    %v132 = vld [vmem:[%s3 + $0xd8] sm:$0xff]
    %v133 = vld [vmem:[%s3 + $0xe0] sm:$0xff]
    %v134 = vld [vmem:[%s3 + $0xe8] sm:$0xff]
    %v135 = vld [vmem:[%s3 + $0xf0] sm:$0xff]
    %v136 = vld [vmem:[%s3 + $0xf8] sm:$0xff]
    %v137 = vld [vmem:[%s4] sm:$0x3]
    %v139 = vlaneseq
    %v140 = vshrl.u32 %v139, 7
    %v141 = vsub.s32 0, %v140
    %v142 = vrot.slane %v137, %v141
    %v143 = vlaneseq
    %v144 = vshrl.u32 %v143, 7
    %v145 = vsub.s32 1, %v144
    %v146 = vrot.slane %v137, %v145
    %v181 = vunpack.c.l.b16 %v105
    %v182 = vunpack.c.h.b16 %v105
    %v183 = vunpack.c.l.b16 %v106
    %v184 = vunpack.c.h.b16 %v106
    %v185 = vunpack.c.l.b16 %v107
    %v186 = vunpack.c.h.b16 %v107
    %v187 = vunpack.c.l.b16 %v108
    %v188 = vunpack.c.h.b16 %v108
    %v189 = vunpack.c.l.b16 %v109
    %v190 = vunpack.c.h.b16 %v109
    %v191 = vunpack.c.l.b16 %v110
    %v192 = vunpack.c.h.b16 %v110
    %v193 = vunpack.c.l.b16 %v111
    %v194 = vunpack.c.h.b16 %v111
    %v195 = vunpack.c.l.b16 %v112
    %v196 = vunpack.c.h.b16 %v112
    %v197 = vunpack.c.l.b16 %v113
    %v198 = vunpack.c.h.b16 %v113
    %v199 = vunpack.c.l.b16 %v114
    %v200 = vunpack.c.h.b16 %v114
    %v201 = vunpack.c.l.b16 %v115
    %v202 = vunpack.c.h.b16 %v115
    %v203 = vunpack.c.l.b16 %v116
    %v204 = vunpack.c.h.b16 %v116
    %v205 = vunpack.c.l.b16 %v117
    %v206 = vunpack.c.h.b16 %v117
    %v207 = vunpack.c.l.b16 %v118
    %v208 = vunpack.c.h.b16 %v118
    %v209 = vunpack.c.l.b16 %v119
    %v210 = vunpack.c.h.b16 %v119
    %v211 = vunpack.c.l.b16 %v120
    %v212 = vunpack.c.h.b16 %v120
    %v213 = vunpack.c.l.b16 %v121
    %v214 = vunpack.c.h.b16 %v121
    %v215 = vunpack.c.l.b16 %v122
    %v216 = vunpack.c.h.b16 %v122
    %v217 = vunpack.c.l.b16 %v123
    %v218 = vunpack.c.h.b16 %v123
    %v219 = vunpack.c.l.b16 %v124
    %v220 = vunpack.c.h.b16 %v124
    %v221 = vunpack.c.l.b16 %v125
    %v222 = vunpack.c.h.b16 %v125
    %v223 = vunpack.c.l.b16 %v126
    %v224 = vunpack.c.h.b16 %v126
    %v225 = vunpack.c.l.b16 %v127
    %v226 = vunpack.c.h.b16 %v127
    %v227 = vunpack.c.l.b16 %v128
    %v228 = vunpack.c.h.b16 %v128
    %v229 = vunpack.c.l.b16 %v129
    %v230 = vunpack.c.h.b16 %v129
    %v231 = vunpack.c.l.b16 %v130
    %v232 = vunpack.c.h.b16 %v130
    %v233 = vunpack.c.l.b16 %v131
    %v234 = vunpack.c.h.b16 %v131
    %v235 = vunpack.c.l.b16 %v132
    %v236 = vunpack.c.h.b16 %v132
    %v237 = vunpack.c.l.b16 %v133
    %v238 = vunpack.c.h.b16 %v133
    %v239 = vunpack.c.l.b16 %v134
    %v240 = vunpack.c.h.b16 %v134
    %v241 = vunpack.c.l.b16 %v135
    %v242 = vunpack.c.h.b16 %v135
    %v243 = vunpack.c.l.b16 %v136
    %v244 = vunpack.c.h.b16 %v136
    %v245 = vpack.c.b16 %v183, %v181
    %v246 = vpack.c.b16 %v184, %v182
    %v247 = vpack.c.b16 %v187, %v185
    %v248 = vpack.c.b16 %v188, %v186
    %v249 = vpack.c.b16 %v191, %v189
    %v250 = vpack.c.b16 %v192, %v190
    %v251 = vpack.c.b16 %v195, %v193
    %v252 = vpack.c.b16 %v196, %v194
    %v253 = vpack.c.b16 %v199, %v197
    %v254 = vpack.c.b16 %v200, %v198
    %v255 = vpack.c.b16 %v203, %v201
    %v256 = vpack.c.b16 %v204, %v202
    %v257 = vpack.c.b16 %v207, %v205
    %v258 = vpack.c.b16 %v208, %v206
    %v259 = vpack.c.b16 %v211, %v209
    %v260 = vpack.c.b16 %v212, %v210
    %v261 = vpack.c.b16 %v215, %v213
    %v262 = vpack.c.b16 %v216, %v214
    %v263 = vpack.c.b16 %v219, %v217
    %v264 = vpack.c.b16 %v220, %v218
    %v265 = vpack.c.b16 %v223, %v221
    %v266 = vpack.c.b16 %v224, %v222
    %v267 = vpack.c.b16 %v227, %v225
    %v268 = vpack.c.b16 %v228, %v226
    %v269 = vpack.c.b16 %v231, %v229
    %v270 = vpack.c.b16 %v232, %v230
    %v271 = vpack.c.b16 %v235, %v233
    %v272 = vpack.c.b16 %v236, %v234
    %v273 = vpack.c.b16 %v239, %v237
    %v274 = vpack.c.b16 %v240, %v238
    %v275 = vpack.c.b16 %v243, %v241
    %v276 = vpack.c.b16 %v244, %v242
    %309 = vmatprep.subr.bf16.mxu0 %v246
    %310 = vmatpush1.bf16.msra.mxu0 %v245
    %311 = vmatprep.subr.bf16.mxu0 %v248
    %312 = vmatpush1.bf16.msra.mxu0 %v247
    %313 = vmatprep.subr.bf16.mxu0 %v250
    %314 = vmatpush1.bf16.msra.mxu0 %v249
    %315 = vmatprep.subr.bf16.mxu0 %v252
    %316 = vmatpush1.bf16.msra.mxu0 %v251
    %317 = vmatprep.subr.bf16.mxu0 %v254
    %318 = vmatpush1.bf16.msra.mxu0 %v253
    %319 = vmatprep.subr.bf16.mxu0 %v256
    %320 = vmatpush1.bf16.msra.mxu0 %v255
    %321 = vmatprep.subr.bf16.mxu0 %v258
    %322 = vmatpush1.bf16.msra.mxu0 %v257
    %323 = vmatprep.subr.bf16.mxu0 %v260
    %324 = vmatpush1.bf16.msra.mxu0 %v259
    %325 = vmatprep.subr.bf16.mxu0 %v262
    %326 = vmatpush1.bf16.msra.mxu0 %v261
    %327 = vmatprep.subr.bf16.mxu0 %v264
    %328 = vmatpush1.bf16.msra.mxu0 %v263
    %329 = vmatprep.subr.bf16.mxu0 %v266
    %330 = vmatpush1.bf16.msra.mxu0 %v265
    %331 = vmatprep.subr.bf16.mxu0 %v268
    %332 = vmatpush1.bf16.msra.mxu0 %v267
    %333 = vmatprep.subr.bf16.mxu0 %v270
    %334 = vmatpush1.bf16.msra.mxu0 %v269
    %335 = vmatprep.subr.bf16.mxu0 %v272
    %336 = vmatpush1.bf16.msra.mxu0 %v271
    %337 = vmatprep.subr.bf16.mxu0 %v274
    %338 = vmatpush1.bf16.msra.mxu0 %v273
    %339 = vmatprep.subr.bf16.mxu0 %v276
    %340 = vmatpush1.bf16.msra.mxu0 %v275
    %341 = vmatprep.mubr.bf16.mxu0 %v104
    %342 = vmatmul.mubr.bf16.gmra.mrb[0].mxu0 %v103
    %v343 = vpop.f32.mrb[0].mxu0
    %v344 = vadd.f32 %v142, %v343
    %v345 = vpop.f32.mrb[0].mxu0
    %v346 = vadd.f32 %v146, %v345
    %v347 = vpop.f32.mrb[0].mxu0
    %v348 = vpop.f32.mrb[0].mxu0
    %349 = vdwg.mxu0
    %v350 = vmax.f32 %v344, 0.0
    %v351 = vmax.f32 %v346, 0.0
    %v352 = vld [vmem:[%s5] sm:$0x3]
    %v353 = vpack.c.bf16 %v350, %v350
    %v354 = vpack.c.bf16 %v351, %v351
    %v355 = vld [vmem:[#allocation2] sm:$0x1]
    %357 = vset.pattern.permute.xlu0 0
    %358 = vperm.xlu0 %357, %v355
    %v359 = vpop.permute.xlu0 %358
    %v361 = vlaneseq
    %v362 = vshrl.u32 %v361, 7
    %v363 = vsub.s32 0, %v362
    %v364 = vrot.slane %v359, %v363
    %v367 = vunpack.c.l.s4 1966171168
    %v368 = vunpack.c.0.s8 %v367
    %v369 = vlaneseq
    %v370 = vshrl.u32 %v369, 7
    %v371 = vsub.s32 %v368, %v370
    %v372 = vrot.slane %v352, %v371
    %v373 = vcombine.high %v372, %v372
    %v375 = vunpack.c.l.s4 1966171168
    %v376 = vunpack.c.0.s8 %v375
    %v377 = vlaneseq
    %v378 = vshrl.u32 %v377, 7
    %v379 = vsub.s32 %v376, %v378
    %v380 = vrot.slane %v372, %v379
    %v382 = vunpack.c.l.s4 1966171168
    %v383 = vunpack.c.0.s8 %v382
    %v384 = vlaneseq
    %v385 = vshrl.u32 %v384, 7
    %v386 = vsub.s32 %v383, %v385
    %v387 = vrot.slane %v373, %v386
    %390 = vmatprep.subr.bf16.mxu0 %v354
    %391 = vmatpush1.bf16.xpose.msra.mxu0 %v353
    %392 = vmatprep.subr.bf16.mxu0 0
    %393 = vmatpush1.bf16.xpose.msra.mxu0 0
    %394 = vmatprep.subr.bf16.mxu0 0
    %395 = vmatpush1.bf16.xpose.msra.mxu0 0
    %396 = vmatprep.subr.bf16.mxu0 0
    %397 = vmatpush1.bf16.xpose.msra.mxu0 0
    %398 = vmatprep.subr.bf16.mxu0 0
    %399 = vmatpush1.bf16.xpose.msra.mxu0 0
    %400 = vmatprep.subr.bf16.mxu0 0
    %401 = vmatpush1.bf16.xpose.msra.mxu0 0
    %402 = vmatprep.subr.bf16.mxu0 0
    %403 = vmatpush1.bf16.xpose.msra.mxu0 0
    %404 = vmatprep.subr.bf16.mxu0 0
    %405 = vmatpush1.bf16.xpose.msra.mxu0 0
    %406 = vmatprep.subr.bf16.mxu0 0
    %407 = vmatpush1.bf16.xpose.msra.mxu0 0
    %408 = vmatprep.subr.bf16.mxu0 0
    %409 = vmatpush1.bf16.xpose.msra.mxu0 0
    %410 = vmatprep.subr.bf16.mxu0 0
    %411 = vmatpush1.bf16.xpose.msra.mxu0 0
    %412 = vmatprep.subr.bf16.mxu0 0
    %413 = vmatpush1.bf16.xpose.msra.mxu0 0
    %414 = vmatprep.subr.bf16.mxu0 0
    %415 = vmatpush1.bf16.xpose.msra.mxu0 0
    %416 = vmatprep.subr.bf16.mxu0 0
    %417 = vmatpush1.bf16.xpose.msra.mxu0 0
    %418 = vmatprep.subr.bf16.mxu0 0
    %419 = vmatpush1.bf16.xpose.msra.mxu0 0
    %420 = vmatprep.subr.bf16.mxu0 0
    %421 = vmatpush1.bf16.xpose.msra.mxu0 0
    %422 = vmatprep.mubr.bf16.mxu0 %v387
    %423 = vmatmul.mubr.bf16.gmra.mrb[0].mxu0 %v380
    %v424 = vpop.f32.mrb[0].mxu0
    %v425 = vadd.f32 %v364, %v424
    %v426 = vpop.f32.mrb[0].mxu0
    %v427 = vpop.f32.mrb[0].mxu0
    %v428 = vpop.f32.mrb[0].mxu0
    %429 = vdwg.mxu0
    %vm430 = vcmask 57344
    %431 = vst.msk [vmem:[#allocation3] sm:$0x1] %vm430, %v425
    // Predicated region
    $region30: #{critic_forward.1} parent=1 // pred_check
      _
    $region31: #{critic_forward.1} parent=1 // pred_check_branch
      %433 = sbr.rel (0) target = $region33
    $region32: #{critic_forward.1} parent=1 // pred_region
      %s435 = ssub.s32 16, 16
      %436 = vsyncadd [#allocation4], %s435
      %s438 = sshll.u32 [#allocation3], 4
      %s439 = int_to_ptr.vmem [resolvable:$true] %s438
      %441 = dma.vmem_to_hbm [thread:$0]  %s439, 16, %s7, [#allocation4]
    $region33: #{critic_forward.1} parent=1 // pred_fallthru
      _
    // Predicated region
    $region34: #{critic_forward.1} parent=1 // pred_check
      _
    $region35: #{critic_forward.1} parent=1 // pred_check_branch
      %443 = sbr.rel (0) target = $region37
    $region36: #{critic_forward.1} parent=1 // pred_region
      %444 = dma.done [#allocation4], 16
    $region37: #{critic_forward.1} parent=1 // pred_fallthru
      _
    %445 = vsyncpa [#allocation4], 1

</llo_original>
